<compile_context>
chip_gen: v5e
topology: v5e:2x2
jax: 0.10.0
libtpu: 0.0.40
codegen_flags: <defaults>
</compile_context>

<pallas_src>
import jax
import jax.numpy as jnp
from jax.experimental import pallas as pl
from jax.experimental.pallas import tpu as pltpu


def _round_up(x, m):
    return ((x + m - 1) // m) * m


def _pick_tb(batch, hw, k, target_bytes=2 << 20):
    """Largest TB dividing `batch` s.t. the (TB, HW, K) bf16 patch block stays
    <= ~2 MiB and the grid keeps >= 2 steps (feed both v7x TensorCores)."""
    per_image = hw * k * 2  # bf16 bytes
    best = 1
    for tb in range(1, batch + 1):
        if batch % tb:
            continue
        if tb * per_image > target_bytes:
            break
        if batch >= 2 and batch // tb < 2:
            break
        best = tb
    return best


def _conv_embed_kernel(p_ref, w_ref, b_ref, emb_ref):
    # p_ref:   (TB, HW, K)  bf16 im2col patches (K = 9*Cin, unpadded)
    # w_ref:   (K, CP)      bf16 conv weight (only Cout padded to lane width)
    # b_ref:   (1, CP)      f32  conv bias (zero-padded)
    # emb_ref: (TB, 1, CP)  f32  pooled embeddings (lane-dense output block)
    tb, hw, k = p_ref.shape
    cp = w_ref.shape[1]

    # One MXU matmul over all TB images at once (M = TB*HW), f32 accumulation;
    # bias + ReLU epilogue in f32 on the VPU.
    lhs = p_ref[...].reshape(tb * hw, k)
    acc = jnp.dot(lhs, w_ref[...], preferred_element_type=jnp.float32)
    acc = jnp.maximum(acc + b_ref[...], 0.0)

    # Global average pool as a cross-sublane reduce (VPU/XLU, free-ish filler
    # under the MXU matmul) instead of an M=1 f32 pooling matmul.
    acc = acc.reshape(tb, hw, cp)
    emb_ref[...] = jnp.sum(acc, axis=1, keepdims=True) * (1.0 / hw)


def embedding_extractor_forward(x_nchw, conv_w, conv_b, lin_w, lin_b):
    """Mirror of EmbeddingExtractor.forward: runs the wrapped model and returns
    the tensor captured by the hook on `model.linear` (the pooled features)."""
    B, Cin, H, W = x_nchw.shape
    Cout = conv_w.shape[0]            # torch conv weight layout (Cout, Cin, 3, 3)
    HW = H * W
    K = 9 * Cin                       # contraction dim, kept unpadded
    CP = _round_up(max(Cout, 128), 128)   # output dim padded -> lane-dense store
    TB = _pick_tb(B, HW, K)

    # --- glue: layout plumbing only (candidate for input fusion) -----------
    x = jnp.transpose(x_nchw, (0, 2, 3, 1))                    # NCHW -> NHWC
    xp = jnp.pad(x, ((0, 0), (1, 1), (1, 1), (0, 0)))          # pad=1 (SAME)
    # im2col: (B, H*W, 9*Cin), patch order (dy, dx, cin)
    patches = jnp.concatenate(
        [xp[:, dy:dy + H, dx:dx + W, :] for dy in range(3) for dx in range(3)],
        axis=-1,
    ).reshape(B, HW, K).astype(jnp.bfloat16)

    # conv weight OIHW -> (dy, dx, cin, cout) -> (K, Cout); pad only Cout.
    w_mat = jnp.transpose(conv_w, (2, 3, 1, 0)).reshape(K, Cout)
    w_mat = jnp.pad(w_mat, ((0, 0), (0, CP - Cout))).astype(jnp.bfloat16)
    b_mat = jnp.pad(conv_b, (0, CP - Cout)).reshape(1, CP).astype(jnp.float32)

    # --- hot path in Pallas -------------------------------------------------
    emb = pl.pallas_call(
        _conv_embed_kernel,
        out_shape=jax.ShapeDtypeStruct((B, 1, CP), jnp.float32),
        grid_spec=pltpu.PrefetchScalarGridSpec(
            num_scalar_prefetch=0,
            grid=(B // TB,),
            in_specs=[
                pl.BlockSpec((TB, HW, K), lambda i: (i, 0, 0)),
                pl.BlockSpec((K, CP), lambda i: (0, 0)),    # weight, resident
                pl.BlockSpec((1, CP), lambda i: (0, 0)),    # bias, resident
            ],
            out_specs=pl.BlockSpec((TB, 1, CP), lambda i: (i, 0, 0)),
        ),
        compiler_params=pltpu.CompilerParams(
            dimension_semantics=("parallel",),
            # One bool per operand: allow XLA to fuse the im2col producer of
            # the patches operand into the Pallas input DMA (no HBM round trip
            # for the largest tensor touched).
            allow_input_fusion=[True, False, False],
        ),
    )(patches, w_mat, b_mat)

    emb = emb.reshape(B, CP)[:, :Cout]

    # The wrapped model also evaluates its classifier head; the extractor
    # discards that output (only the hook-captured linear *input* is returned).
    # XLA DCEs this — kept only to mirror the module's control flow.
    _ = emb @ lin_w.T + lin_b

    # TODO(synk): PyTorch forward-hook registration has no Pallas equivalent;
    # the hook semantics (capture the linear layer's input) are reproduced by
    # returning `emb` directly.
    return emb


def _reference(x_nchw, conv_w, conv_b):
    y = jax.lax.conv_general_dilated(
        x_nchw, conv_w, window_strides=(1, 1), padding="SAME",
        dimension_numbers=("NCHW", "OIHW", "NCHW"))
    y = jnp.maximum(y + conv_b[None, :, None, None], 0.0)
    return y.mean(axis=(2, 3))


if __name__ == "__main__":
    B, Cin, H, W = 2, 4, 16, 16
    Cout, num_classes = 32, 10

    key = jax.random.PRNGKey(0)
    k_x, k_w, k_b, k_lw, k_lb = jax.random.split(key, 5)
    x = jax.random.normal(k_x, (B, Cin, H, W), dtype=jnp.float32)
    conv_w = jax.random.normal(k_w, (Cout, Cin, 3, 3), dtype=jnp.float32) * 0.1
    conv_b = jax.random.normal(k_b, (Cout,), dtype=jnp.float32) * 0.1
    lin_w = jax.random.normal(k_lw, (num_classes, Cout), dtype=jnp.float32) * 0.1
    lin_b = jax.random.normal(k_lb, (num_classes,), dtype=jnp.float32) * 0.1

    fwd = jax.jit(embedding_extractor_forward)
    emb = fwd(x, conv_w, conv_b, lin_w, lin_b)
    emb = jax.block_until_ready(emb)

    ref = _reference(x, conv_w, conv_b)
    assert emb.shape == (B, Cout) and emb.dtype == jnp.float32
    # bf16 matmul operands (f32 accumulation) -> loosened tolerance vs f32 ref.
    assert jnp.allclose(emb, ref, atol=2e-2, rtol=2e-2), "mismatch vs reference"

    print("KERNEL_OK")
</pallas_src>

<mosaic_0001>
module attributes {stable_mosaic.version = 11 : i64} {
  func.func @_conv_embed_kernel(%arg0: i32, %arg1: memref<1x256x36xbf16, #tpu.memory_space<vmem>>, %arg2: memref<36x128xbf16, #tpu.memory_space<vmem>>, %arg3: memref<1x128xf32, #tpu.memory_space<vmem>>, %arg4: memref<1x1x128xf32, #tpu.memory_space<vmem>>) attributes {dimension_semantics = [#tpu.dimension_semantics<parallel>], iteration_bounds = array<i64: 2>, scalar_prefetch = 0 : i64, scratch_operands = 0 : i64, tpu.core_type = #tpu.core_type<tc>, window_params = [{transform_indices = @transform_0, window_bounds = array<i64: 1, 256, 36>}, {pipeline_mode = #tpu.pipeline_mode<synchronous>, transform_indices = @transform_1, window_bounds = array<i64: 36, 128>}, {pipeline_mode = #tpu.pipeline_mode<synchronous>, transform_indices = @transform_2, window_bounds = array<i64: 1, 128>}, {transform_indices = @transform_3, window_bounds = array<i64: 1, 1, 128>}]} {
    %c0 = arith.constant 0 : index
    %c0_0 = arith.constant 0 : index
    %c0_1 = arith.constant 0 : index
    %0 = vector.load %arg1[%c0, %c0_0, %c0_1] : memref<1x256x36xbf16, #tpu.memory_space<vmem>>, vector<1x256x36xbf16>
    %1 = vector.shape_cast %0 : vector<1x256x36xbf16> to vector<256x36xbf16>
    %c0_2 = arith.constant 0 : index
    %c0_3 = arith.constant 0 : index
    %2 = vector.load %arg2[%c0_2, %c0_3] : memref<36x128xbf16, #tpu.memory_space<vmem>>, vector<36x128xbf16>
    %cst = arith.constant dense<0.000000e+00> : vector<256x128xf32>
    %3 = tpu.matmul %1, %2, %cst {dimension_numbers = #tpu.dot_dimension_numbers<[1], [0], [0], [1], [0, 0, 1, 1], [], []>} : vector<256x36xbf16>, vector<36x128xbf16>, vector<256x128xf32> -> vector<256x128xf32>
    %c0_4 = arith.constant 0 : index
    %c0_5 = arith.constant 0 : index
    %4 = vector.load %arg3[%c0_4, %c0_5] : memref<1x128xf32, #tpu.memory_space<vmem>>, vector<1x128xf32>
    %5 = vector.broadcast %4 : vector<1x128xf32> to vector<256x128xf32>
    %6 = arith.addf %3, %5 : vector<256x128xf32>
    %cst_6 = arith.constant 0.000000e+00 : f32
    %7 = vector.broadcast %cst_6 : f32 to vector<256x128xf32>
    %8 = arith.maximumf %6, %7 : vector<256x128xf32>
    %9 = vector.shape_cast %8 : vector<256x128xf32> to vector<1x256x128xf32>
    %cst_7 = arith.constant dense<0.000000e+00> : vector<1x128xf32>
    %10 = vector.multi_reduction <add>, %9, %cst_7 [1] : vector<1x256x128xf32> to vector<1x128xf32>
    %11 = vector.shape_cast %10 : vector<1x128xf32> to vector<1x1x128xf32>
    %cst_8 = arith.constant 3.906250e-03 : f32
    %12 = vector.broadcast %cst_8 : f32 to vector<1x1x128xf32>
    %13 = arith.mulf %11, %12 : vector<1x1x128xf32>
    %c0_9 = arith.constant 0 : index
    %c0_10 = arith.constant 0 : index
    %c0_11 = arith.constant 0 : index
    %14 = vector.load %arg4[%c0_9, %c0_10, %c0_11] : memref<1x1x128xf32, #tpu.memory_space<vmem>>, vector<1x1x128xf32>
    tpu.vector_store %arg4[%c0_9, %c0_10, %c0_11], %13 {strides = array<i32>} : memref<1x1x128xf32, #tpu.memory_space<vmem>>, vector<1x1x128xf32>,
    return
  }
  func.func @transform_0(%arg0: i32) -> (i32, i32, i32) {
    %c0_i32 = arith.constant 0 : i32
    %c0_i32_0 = arith.constant 0 : i32
    %c0_i32_1 = arith.constant 0 : i32
    return %arg0, %c0_i32, %c0_i32_0 : i32, i32, i32
  }
  func.func @transform_1(%arg0: i32) -> (i32, i32) {
    %c0_i32 = arith.constant 0 : i32
    %c0_i32_0 = arith.constant 0 : i32
    %c0_i32_1 = arith.constant 0 : i32
    return %c0_i32, %c0_i32_0 : i32, i32
  }
  func.func @transform_2(%arg0: i32) -> (i32, i32) {
    %c0_i32 = arith.constant 0 : i32
    %c0_i32_0 = arith.constant 0 : i32
    %c0_i32_1 = arith.constant 0 : i32
    return %c0_i32, %c0_i32_0 : i32, i32
  }
  func.func @transform_3(%arg0: i32) -> (i32, i32, i32) {
    %c0_i32 = arith.constant 0 : i32
    %c0_i32_0 = arith.constant 0 : i32
    %c0_i32_1 = arith.constant 0 : i32
    return %arg0, %c0_i32, %c0_i32_0 : i32, i32, i32
  }
}

</mosaic_0001>

<llo_original>
// kernel: embedding_extractor_forward.1
$region0: #{embedding_extractor_forward.1}
  #allocation0 [shape = 'u32[]', space=smem, size = 0x4, offset = 0x4, fixed_abs, tag = 'smem constant byte address 0x4 - core index']
  #allocation1 [shape = 'u32[72,128]{1,0:T(1,128)}', space=vmem, size = 0x9000, scoped, tag = 'internal scratch']
  %s0 = inlined_call_operand.vmem [shape: bf16[2,256,36], index: 0, kind: input, shape index: {}]
  %s1 = inlined_call_operand.vmem [shape: bf16[36,128], index: 1, kind: input, shape index: {}]
  %s2 = inlined_call_operand.vmem [shape: f32[1,128], index: 2, kind: input, shape index: {}]
  %s3 = inlined_call_operand.hbm [shape: f32[2,1,128], index: 3, kind: output, shape index: {}]
  %s4 = sld [smem:[#allocation0]]
  $region45: #{embedding_extractor_forward.1} parent=0
    _
  %s6 = ssub.s32 1, %s4
  %s7 = scalar_select 0, %s6, %s4
  $region1: #{embedding_extractor_forward.1} parent=0
    #allocation2 [shape = 'u8[1024]{0}', space=vmem, size = 0x400, scoped, tag = 'output window, operand 0']
    #allocation3 [shape = 's32[2]{0}', space=sflag, size = 0x8, scoped, tag = 'scoped memory for embedding_extractor_forward.1']
    %8 = vsyncpa [#allocation3], 0
    %s9 = scalar_lea.sflag [#allocation3], 1
    %10 = vsyncpa %s9, 0
    loop: start=0, step=1, limit=4
    $region2: #{embedding_extractor_forward.1} parent=1 // loop_pre_header
      _
    $region3: #{embedding_extractor_forward.1} parent=1 // loop_header
      %s12 = sphi 0, %s16
      %p13 = scmp.ge.s32.totalorder %s12, 4
      %s22 = sphi 0, %s24
      %s25 = sphi 0, %s22
      %s26 = sphi 0, %s25
      %s42 = sphi 0, %s26
      %s46 = sphi 0, %s46
      %s48 = sphi 0, %s46
      %s49 = sphi 0, %s48
      %s63 = sphi 0, %s49
      %s67 = sphi 0, %s67
      %s69 = sphi 0, %s67
      %s70 = sphi 0, %s69
      %s84 = sphi 0, %s70
      %s90 = sphi 0, %s92
      %s93 = sphi 0, %s90
      %s94 = sphi 0, %s93
      %s110 = sphi 0, %s94
    $region4: #{embedding_extractor_forward.1} parent=1 // loop_header_branch
      %15 = sbr.rel (%p13) target = $region8
    $region5: #{embedding_extractor_forward.1} parent=1 // loop_body
      %s17 = ssub.s32 %s12, 1
      %s18 = ssub.s32 %s12, 2
      %s19 = sadd.s32 %s12, 1
      %s20 = ssub.s32 %s12, %s19
      %p21 = scmp.eq.s32.totalorder %s20, 0
      %s23 = sadd.s32 %s22, 1
      %s24 = scalar_select %p21, %s22, %s23
      %p27 = pneg %p21
      %p28 = scmp.eq.s32.totalorder %s12, 1
      %p29 = por %p27, %p28
      %p30 = scmp.ne.s32.totalorder %s22, %s25
      %p31 = scmp.eq.s32.totalorder %s12, 0
      %p32 = por %p30, %p31
      %p33 = scmp.ne.s32.totalorder %s22, %s25
      %p34 = scmp.eq.s32.totalorder %s17, 1
      %p35 = por %p33, %p34
      %p36 = scmp.ne.s32.totalorder %s25, %s26
      %p37 = scmp.eq.s32.totalorder %s17, 0
      %p38 = por %p36, %p37
      %p39 = scmp.ne.s32.totalorder %s25, %s26
      %p40 = scmp.eq.s32.totalorder %s18, 1
      %p41 = por %p39, %p40
      %p43 = scmp.ne.s32.totalorder %s26, %s42
      %p44 = scmp.eq.s32.totalorder %s18, 0
      %p45 = por %p43, %p44
      %s47 = sadd.s32 %s46, 1
      %p50 = scmp.eq.s32.totalorder %s12, 1
      %p51 = scmp.ne.s32.totalorder %s46, %s48
      %p52 = scmp.eq.s32.totalorder %s12, 0
      %p53 = por %p51, %p52
      %p54 = scmp.ne.s32.totalorder %s46, %s48
      %p55 = scmp.eq.s32.totalorder %s17, 1
      %p56 = por %p54, %p55
      %p57 = scmp.ne.s32.totalorder %s48, %s49
      %p58 = scmp.eq.s32.totalorder %s17, 0
      %p59 = por %p57, %p58
      %p60 = scmp.ne.s32.totalorder %s48, %s49
      %p61 = scmp.eq.s32.totalorder %s18, 1
      %p62 = por %p60, %p61
      %p64 = scmp.ne.s32.totalorder %s49, %s63
      %p65 = scmp.eq.s32.totalorder %s18, 0
      %p66 = por %p64, %p65
      %s68 = sadd.s32 %s67, 1
      %p71 = scmp.eq.s32.totalorder %s12, 1
      %p72 = scmp.ne.s32.totalorder %s67, %s69
      %p73 = scmp.eq.s32.totalorder %s12, 0
      %p74 = por %p72, %p73
      %p75 = scmp.ne.s32.totalorder %s67, %s69
      %p76 = scmp.eq.s32.totalorder %s17, 1
      %p77 = por %p75, %p76
      %p78 = scmp.ne.s32.totalorder %s69, %s70
      %p79 = scmp.eq.s32.totalorder %s17, 0
      %p80 = por %p78, %p79
      %p81 = scmp.ne.s32.totalorder %s69, %s70
      %p82 = scmp.eq.s32.totalorder %s18, 1
      %p83 = por %p81, %p82
      %p85 = scmp.ne.s32.totalorder %s70, %s84
      %p86 = scmp.eq.s32.totalorder %s18, 0
      %p87 = por %p85, %p86
      %s88 = ssub.s32 %s12, %s19
      %p89 = scmp.eq.s32.totalorder %s88, 0
      %s91 = sadd.s32 %s90, 1
      %s92 = scalar_select %p89, %s90, %s91
      %p95 = pneg %p89
      %p96 = scmp.eq.s32.totalorder %s12, 1
      %p97 = por %p95, %p96
      %p98 = scmp.ne.s32.totalorder %s90, %s93
      %p99 = scmp.eq.s32.totalorder %s12, 0
      %p100 = por %p98, %p99
      %p101 = scmp.ne.s32.totalorder %s90, %s93
      %p102 = scmp.eq.s32.totalorder %s17, 1
      %p103 = por %p101, %p102
      %p104 = scmp.ne.s32.totalorder %s93, %s94
      %p105 = scmp.eq.s32.totalorder %s17, 0
      %p106 = por %p104, %p105
      %p107 = scmp.ne.s32.totalorder %s93, %s94
      %p108 = scmp.eq.s32.totalorder %s18, 1
      %p109 = por %p107, %p108
      %p111 = scmp.ne.s32.totalorder %s94, %s110
      %p112 = scmp.eq.s32.totalorder %s18, 0
      %p113 = por %p111, %p112
      %p114 = scmp.le.s32.totalorder 1, %s12
      %p115 = scmp.lt.s32.totalorder %s12, 3
      %p116 = pnand %p114, %p115
      %p117 = pneg %p116
      // Predicated region
      $region9: #{embedding_extractor_forward.1} parent=5 // pred_check
        _
      $region10: #{embedding_extractor_forward.1} parent=5 // pred_check_branch
        %119 = sbr.rel (%p116) target = $region12
      $region11: #{embedding_extractor_forward.1} parent=5 // pred_region
        %s120 = ssub.s32 %s12, 1
        // Predicated region
        $region13: #{embedding_extractor_forward.1} parent=11 // pred_check
          %p121 = pneg %p59
        $region14: #{embedding_extractor_forward.1} parent=11 // pred_check_branch
          %123 = sbr.rel (%p121) target = $region16
        $region15: #{embedding_extractor_forward.1} parent=11 // pred_region
          _
        $region16: #{embedding_extractor_forward.1} parent=11 // pred_fallthru
          _
        // Predicated region
        $region17: #{embedding_extractor_forward.1} parent=11 // pred_check
          %p124 = pneg %p80
        $region18: #{embedding_extractor_forward.1} parent=11 // pred_check_branch
          %126 = sbr.rel (%p124) target = $region20
        $region19: #{embedding_extractor_forward.1} parent=11 // pred_region
          _
        $region20: #{embedding_extractor_forward.1} parent=11 // pred_fallthru
          _
      $region12: #{embedding_extractor_forward.1} parent=5 // pred_fallthru
        _
      %p127 = scmp.lt.s32.totalorder %s12, 2
      // Predicated region
      $region21: #{embedding_extractor_forward.1} parent=5 // pred_check
        %p128 = pneg %p127
      $region22: #{embedding_extractor_forward.1} parent=5 // pred_check_branch
        %130 = sbr.rel (%p128) target = $region24
      $region23: #{embedding_extractor_forward.1} parent=5 // pred_region
        // Predicated region
        $region25: #{embedding_extractor_forward.1} parent=23 // pred_check
          %p131 = pneg %p32
        $region26: #{embedding_extractor_forward.1} parent=23 // pred_check_branch
          %133 = sbr.rel (%p131) target = $region28
        $region27: #{embedding_extractor_forward.1} parent=23 // pred_region
          %p134 = scmp.lt.s32.totalorder %s12, 1
          %s135 = scalar_select %p134, %s12, 1
          %s136 = smul.addr %s135, 32
          %s137 = smul.addr %s136, 4
          %s138 = scalar_lea.vmem %s0, %s137
        $region28: #{embedding_extractor_forward.1} parent=23 // pred_fallthru
          _
      $region24: #{embedding_extractor_forward.1} parent=5 // pred_fallthru
        _
      %p139 = scmp.le.s32.totalorder 1, %s12
      %p140 = scmp.lt.s32.totalorder %s12, 3
      %p141 = pnand %p139, %p140
      %p142 = pneg %p141
      // Predicated region
      $region29: #{embedding_extractor_forward.1} parent=5 // pred_check
        _
      $region30: #{embedding_extractor_forward.1} parent=5 // pred_check_branch
        %144 = sbr.rel (%p141) target = $region32
      $region31: #{embedding_extractor_forward.1} parent=5 // pred_region
        %s145 = ssub.s32 %s12, 1
        %p146 = scmp.lt.s32.totalorder %s17, 1
        %s147 = scalar_select %p146, %s17, 1
        %s148 = smul.addr %s147, 32
        %s149 = smul.addr %s148, 4
        %s150 = scalar_lea.vmem %s0, %s149
        %p151 = pneg %p38
        %p152 = pneg %p35
        %p153 = pneg %p59
        %p154 = pneg %p56
        %p155 = pneg %p80
        %p156 = pneg %p77
        %p157 = pneg %p106
        %p158 = pneg %p103
        %s159 = sand.u32 %s93, 1
        %s160 = scalar_lea.sflag [#allocation3], %s159
        %s161 = sand.u32 %s93, 1
        %s162 = scalar_lea.vmem [#allocation2], %s161
        %p163 = scmp.lt.s32.totalorder %s17, 1
        %s164 = scalar_select %p163, %s17, 1
        %s165 = smul.addr %s164, 32
        %s166 = smul.addr %s165, 4
        %s167 = scalar_lea.vmem %s0, %s166
        %v169 = vld [vmem:[%s167] sm:$0xf]
        %v170 = vld [vmem:[%s167 + $0x4] sm:$0xf]
        %v171 = vld [vmem:[%s167 + $0x8] sm:$0xf]
        %v172 = vld [vmem:[%s167 + $0xc] sm:$0xf]
        %v173 = vld [vmem:[%s167 + $0x10] sm:$0xf]
        %v174 = vld [vmem:[%s167 + $0x14] sm:$0xf]
        %v175 = vld [vmem:[%s167 + $0x18] sm:$0xf]
        %v176 = vld [vmem:[%s167 + $0x1c] sm:$0xf]
        %v177 = vld [vmem:[%s167 + $0x20] sm:$0xf]
        %v178 = vld [vmem:[%s167 + $0x24] sm:$0xf]
        %v179 = vld [vmem:[%s167 + $0x28] sm:$0xf]
        %v180 = vld [vmem:[%s167 + $0x2c] sm:$0xf]
        %v181 = vld [vmem:[%s167 + $0x30] sm:$0xf]
        %v182 = vld [vmem:[%s167 + $0x34] sm:$0xf]
        %v183 = vld [vmem:[%s167 + $0x38] sm:$0xf]
        %v184 = vld [vmem:[%s167 + $0x3c] sm:$0xf]
        %v185 = vld [vmem:[%s167 + $0x40] sm:$0xf]
        %v186 = vld [vmem:[%s167 + $0x44] sm:$0xf]
        %v187 = vld [vmem:[%s167 + $0x48] sm:$0xf]
        %v188 = vld [vmem:[%s167 + $0x4c] sm:$0xf]
        %v189 = vld [vmem:[%s167 + $0x50] sm:$0xf]
        %v190 = vld [vmem:[%s167 + $0x54] sm:$0xf]
        %v191 = vld [vmem:[%s167 + $0x58] sm:$0xf]
        %v192 = vld [vmem:[%s167 + $0x5c] sm:$0xf]
        %v193 = vld [vmem:[%s167 + $0x60] sm:$0xf]
        %v194 = vld [vmem:[%s167 + $0x64] sm:$0xf]
        %v195 = vld [vmem:[%s167 + $0x68] sm:$0xf]
        %v196 = vld [vmem:[%s167 + $0x6c] sm:$0xf]
        %v197 = vld [vmem:[%s167 + $0x70] sm:$0xf]
        %v198 = vld [vmem:[%s167 + $0x74] sm:$0xf]
        %v199 = vld [vmem:[%s167 + $0x78] sm:$0xf]
        %v200 = vld [vmem:[%s167 + $0x7c] sm:$0xf]
        %v201 = vld [vmem:[%s1] sm:$0xf]
        %v202 = vld [vmem:[%s1 + $0x4] sm:$0xf]
        %v203 = vld [vmem:[%s1 + $0x8] sm:$0xf]
        %v204 = vld [vmem:[%s1 + $0xc] sm:$0xf]
        %v205 = vld [vmem:[%s1 + $0x10] sm:$0x3]
        %v206 = vld [vmem:[%s2] sm:$0x1]
        %v208 = vperm.slane %v206, 0
        %v242 = vunpack.c.l.b16 %v169
        %v243 = vunpack.c.l.b16 %v170
        %v244 = vunpack.c.l.b16 %v171
        %v245 = vunpack.c.l.b16 %v172
        %v246 = vunpack.c.l.b16 %v173
        %v247 = vunpack.c.l.b16 %v174
        %v248 = vunpack.c.l.b16 %v175
        %v249 = vunpack.c.l.b16 %v176
        %v250 = vunpack.c.l.b16 %v177
        %v251 = vunpack.c.l.b16 %v178
        %v252 = vunpack.c.l.b16 %v179
        %v253 = vunpack.c.l.b16 %v180
        %v254 = vunpack.c.l.b16 %v181
        %v255 = vunpack.c.l.b16 %v182
        %v256 = vunpack.c.l.b16 %v183
        %v257 = vunpack.c.l.b16 %v184
        %v258 = vunpack.c.l.b16 %v185
        %v259 = vunpack.c.l.b16 %v186
        %v260 = vunpack.c.l.b16 %v187
        %v261 = vunpack.c.l.b16 %v188
        %v262 = vunpack.c.l.b16 %v189
        %v263 = vunpack.c.l.b16 %v190
        %v264 = vunpack.c.l.b16 %v191
        %v265 = vunpack.c.l.b16 %v192
        %v266 = vunpack.c.l.b16 %v193
        %v267 = vunpack.c.l.b16 %v194
        %v268 = vunpack.c.l.b16 %v195
        %v269 = vunpack.c.l.b16 %v196
        %v270 = vunpack.c.l.b16 %v197
        %v271 = vunpack.c.l.b16 %v198
        %v272 = vunpack.c.l.b16 %v199
        %v273 = vunpack.c.l.b16 %v200
        %v274 = vpack.c.b16 %v243, %v242
        %v275 = vpack.c.b16 %v245, %v244
        %v276 = vpack.c.b16 %v247, %v246
        %v277 = vpack.c.b16 %v249, %v248
        %v278 = vpack.c.b16 %v251, %v250
        %v279 = vpack.c.b16 %v253, %v252
        %v280 = vpack.c.b16 %v255, %v254
        %v281 = vpack.c.b16 %v257, %v256
        %v282 = vpack.c.b16 %v259, %v258
        %v283 = vpack.c.b16 %v261, %v260
        %v284 = vpack.c.b16 %v263, %v262
        %v285 = vpack.c.b16 %v265, %v264
        %v286 = vpack.c.b16 %v267, %v266
        %v287 = vpack.c.b16 %v269, %v268
        %v288 = vpack.c.b16 %v271, %v270
        %v289 = vpack.c.b16 %v273, %v272
        %v295 = vunpack.c.l.b16 %v201
        %v296 = vunpack.c.l.b16 %v202
        %v297 = vunpack.c.l.b16 %v203
        %v298 = vunpack.c.l.b16 %v204
        %v299 = vunpack.c.l.b16 %v205
        %v300 = vpack.c.b16 %v296, %v295
        %v301 = vpack.c.b16 %v298, %v297
        %v302 = vpack.c.b16 %v299, %v299
        %vm305 = vcmask 293888
        %v307 = vsel %vm305, %v274, 0
        %v310 = vsel %vm305, %v275, 0
        %v313 = vsel %vm305, %v276, 0
        %v316 = vsel %vm305, %v277, 0
        %v319 = vsel %vm305, %v278, 0
        %v322 = vsel %vm305, %v279, 0
        %v325 = vsel %vm305, %v280, 0
        %v328 = vsel %vm305, %v281, 0
        %v331 = vsel %vm305, %v282, 0
        %v334 = vsel %vm305, %v283, 0
        %v337 = vsel %vm305, %v284, 0
        %v340 = vsel %vm305, %v285, 0
        %v343 = vsel %vm305, %v286, 0
        %v346 = vsel %vm305, %v287, 0
        %v349 = vsel %vm305, %v288, 0
        %v352 = vsel %vm305, %v289, 0
        %vm354 = vcmask 1041408
        %v356 = vsel %vm354, %v302, 0
        %358 = vmatpush.bf16.msra.mxu0 0
        %359 = vmatpush.bf16.msra.mxu0 0
        %360 = vmatpush.bf16.msra.mxu0 0
        %361 = vmatpush.bf16.msra.mxu0 0
        %362 = vmatpush.bf16.msra.mxu0 0
        %363 = vmatpush.bf16.msra.mxu0 %v356
        %364 = vmatpush.bf16.msra.mxu0 %v301
        %365 = vmatpush.bf16.msra.mxu0 %v300
        %366 = vmatmul.bf16.gmra.mxu0 %v307
        %v367 = vpop.f32.mrf.mxu0
        %v368 = vadd.f32 %v208, %v367
        %v369 = vpop.f32.mrf.mxu0
        %v370 = vadd.f32 %v208, %v369
        %371 = vmatmul.bf16.gmra.mxu0 %v310
        %v372 = vpop.f32.mrf.mxu0
        %v373 = vadd.f32 %v208, %v372
        %v374 = vpop.f32.mrf.mxu0
        %v375 = vadd.f32 %v208, %v374
        %376 = vmatmul.bf16.gmra.mxu0 %v313
        %v377 = vpop.f32.mrf.mxu0
        %v378 = vadd.f32 %v208, %v377
        %v379 = vpop.f32.mrf.mxu0
        %v380 = vadd.f32 %v208, %v379
        %381 = vmatmul.bf16.gmra.mxu0 %v316
        %v382 = vpop.f32.mrf.mxu0
        %v383 = vadd.f32 %v208, %v382
        %v384 = vpop.f32.mrf.mxu0
        %v385 = vadd.f32 %v208, %v384
        %386 = vmatmul.bf16.gmra.mxu0 %v319
        %v387 = vpop.f32.mrf.mxu0
        %v388 = vadd.f32 %v208, %v387
        %v389 = vpop.f32.mrf.mxu0
        %v390 = vadd.f32 %v208, %v389
        %391 = vmatmul.bf16.gmra.mxu0 %v322
        %v392 = vpop.f32.mrf.mxu0
        %v393 = vadd.f32 %v208, %v392
        %v394 = vpop.f32.mrf.mxu0
        %v395 = vadd.f32 %v208, %v394
        %396 = vmatmul.bf16.gmra.mxu0 %v325
        %v397 = vpop.f32.mrf.mxu0
        %v398 = vadd.f32 %v208, %v397
        %v399 = vpop.f32.mrf.mxu0
        %v400 = vadd.f32 %v208, %v399
        %401 = vmatmul.bf16.gmra.mxu0 %v328
        %v402 = vpop.f32.mrf.mxu0
        %v403 = vadd.f32 %v208, %v402
        %v404 = vpop.f32.mrf.mxu0
        %v405 = vadd.f32 %v208, %v404
        %406 = vmatmul.bf16.gmra.mxu0 %v331
        %v407 = vpop.f32.mrf.mxu0
        %v408 = vadd.f32 %v208, %v407
        %v409 = vpop.f32.mrf.mxu0
        %v410 = vadd.f32 %v208, %v409
        %411 = vmatmul.bf16.gmra.mxu0 %v334
        %v412 = vpop.f32.mrf.mxu0
        %v413 = vadd.f32 %v208, %v412
        %v414 = vpop.f32.mrf.mxu0
        %v415 = vadd.f32 %v208, %v414
        %416 = vmatmul.bf16.gmra.mxu0 %v337
        %v417 = vpop.f32.mrf.mxu0
        %v418 = vadd.f32 %v208, %v417
        %v419 = vpop.f32.mrf.mxu0
        %v420 = vadd.f32 %v208, %v419
        %421 = vmatmul.bf16.gmra.mxu0 %v340
        %v422 = vpop.f32.mrf.mxu0
        %v423 = vadd.f32 %v208, %v422
        %v424 = vpop.f32.mrf.mxu0
        %v425 = vadd.f32 %v208, %v424
        %426 = vmatmul.bf16.gmra.mxu0 %v343
        %v427 = vpop.f32.mrf.mxu0
        %v428 = vadd.f32 %v208, %v427
        %v429 = vpop.f32.mrf.mxu0
        %v430 = vadd.f32 %v208, %v429
        %431 = vmatmul.bf16.gmra.mxu0 %v346
        %v432 = vpop.f32.mrf.mxu0
        %v433 = vadd.f32 %v208, %v432
        %v434 = vpop.f32.mrf.mxu0
        %v435 = vadd.f32 %v208, %v434
        %436 = vmatmul.bf16.gmra.mxu0 %v349
        %v437 = vpop.f32.mrf.mxu0
        %v438 = vadd.f32 %v208, %v437
        %v439 = vpop.f32.mrf.mxu0
        %v440 = vadd.f32 %v208, %v439
        %441 = vmatmul.bf16.gmra.mxu0 %v352
        %v442 = vpop.f32.mrf.mxu0
        %v443 = vadd.f32 %v208, %v442
        %v444 = vpop.f32.mrf.mxu0
        %v445 = vadd.f32 %v208, %v444
        %446 = vdwg.mxu0
        %v447 = vmax.f32 %v368, 0.0
        %v448 = vmax.f32 %v370, 0.0
        %v449 = vmax.f32 %v373, 0.0
        %v450 = vmax.f32 %v375, 0.0
        %v451 = vmax.f32 %v378, 0.0
        %v452 = vmax.f32 %v380, 0.0
        %v453 = vmax.f32 %v383, 0.0
        %v454 = vmax.f32 %v385, 0.0
        %v455 = vmax.f32 %v388, 0.0
        %v456 = vmax.f32 %v390, 0.0
        %v457 = vmax.f32 %v393, 0.0
        %v458 = vmax.f32 %v395, 0.0
        %v459 = vmax.f32 %v398, 0.0
        %v460 = vmax.f32 %v400, 0.0
        %v461 = vmax.f32 %v403, 0.0
        %v462 = vmax.f32 %v405, 0.0
        %v463 = vmax.f32 %v408, 0.0
        %v464 = vmax.f32 %v410, 0.0
        %v465 = vmax.f32 %v413, 0.0
        %v466 = vmax.f32 %v415, 0.0
        %v467 = vmax.f32 %v418, 0.0
        %v468 = vmax.f32 %v420, 0.0
        %v469 = vmax.f32 %v423, 0.0
        %v470 = vmax.f32 %v425, 0.0
        %v471 = vmax.f32 %v428, 0.0
        %v472 = vmax.f32 %v430, 0.0
        %v473 = vmax.f32 %v433, 0.0
        %v474 = vmax.f32 %v435, 0.0
        %v475 = vmax.f32 %v438, 0.0
        %v476 = vmax.f32 %v440, 0.0
        %v477 = vmax.f32 %v443, 0.0
        %v478 = vmax.f32 %v445, 0.0
        %v479 = vadd.f32 %v447, %v448
        %v480 = vadd.f32 %v479, %v449
        %v481 = vadd.f32 %v480, %v450
        %v482 = vadd.f32 %v481, %v451
        %v483 = vadd.f32 %v482, %v452
        %v484 = vadd.f32 %v483, %v453
        %v485 = vadd.f32 %v484, %v454
        %v486 = vadd.f32 %v485, %v455
        %v487 = vadd.f32 %v486, %v456
        %v488 = vadd.f32 %v487, %v457
        %v489 = vadd.f32 %v488, %v458
        %v490 = vadd.f32 %v489, %v459
        %v491 = vadd.f32 %v490, %v460
        %v492 = vadd.f32 %v491, %v461
        %v493 = vadd.f32 %v492, %v462
        %v494 = vadd.f32 %v493, %v463
        %v495 = vadd.f32 %v494, %v464
        %v496 = vadd.f32 %v495, %v465
        %v497 = vadd.f32 %v496, %v466
        %v498 = vadd.f32 %v497, %v467
        %v499 = vadd.f32 %v498, %v468
        %v500 = vadd.f32 %v499, %v469
        %v501 = vadd.f32 %v500, %v470
        %v502 = vadd.f32 %v501, %v471
        %v503 = vadd.f32 %v502, %v472
        %v504 = vadd.f32 %v503, %v473
        %v505 = vadd.f32 %v504, %v474
        %v506 = vadd.f32 %v505, %v475
        %v507 = vadd.f32 %v506, %v476
        %v508 = vadd.f32 %v507, %v477
        %v509 = vadd.f32 %v508, %v478
        %v510 = vrot.slane %v509, 4
        %v511 = vadd.f32 %v509, %v510
        %v512 = vrot.slane %v511, 2
        %v513 = vadd.f32 %v511, %v512
        %v514 = vrot.slane %v513, 1
        %v515 = vadd.f32 %v513, %v514
        %v516 = vmul.f32 %v515, 0.00390625
        %517 = vst [vmem:[%s162] sm:$0x1] %v516
        %s518 = sand.u32 %s93, 1
        %s519 = scalar_lea.sflag [#allocation3], %s518
        %s520 = sand.u32 %s93, 1
        %s521 = scalar_lea.vmem [#allocation2], %s520
        // Predicated region
        $region33: #{embedding_extractor_forward.1} parent=31 // pred_check
          %p522 = pneg %p103
        $region34: #{embedding_extractor_forward.1} parent=31 // pred_check_branch
          %524 = sbr.rel (%p522) target = $region36
        $region35: #{embedding_extractor_forward.1} parent=31 // pred_region
          %526 = vsyncadd %s519, 0
          %s527 = scalar_lea.hbm %s3, %s17
          %s529 = sshll.u32 %s521, 4
          %s530 = int_to_ptr.vmem [resolvable:$true] %s529
          %s531 = sshll.u32 %s527, 4
          %s532 = int_to_ptr.hbm [resolvable:$true] %s531
          %534 = dma.vmem_to_hbm [thread:$0]  %s530, 16, %s532, %s519
        $region36: #{embedding_extractor_forward.1} parent=31 // pred_fallthru
          _
      $region32: #{embedding_extractor_forward.1} parent=5 // pred_fallthru
        _
      %p535 = scmp.le.s32.totalorder 2, %s12
      // Predicated region
      $region37: #{embedding_extractor_forward.1} parent=5 // pred_check
        %p536 = pneg %p535
      $region38: #{embedding_extractor_forward.1} parent=5 // pred_check_branch
        %538 = sbr.rel (%p536) target = $region40
      $region39: #{embedding_extractor_forward.1} parent=5 // pred_region
        %s539 = ssub.s32 %s12, 2
        // Predicated region
        $region41: #{embedding_extractor_forward.1} parent=39 // pred_check
          %p540 = pneg %p109
        $region42: #{embedding_extractor_forward.1} parent=39 // pred_check_branch
          %542 = sbr.rel (%p540) target = $region44
        $region43: #{embedding_extractor_forward.1} parent=39 // pred_region
          %s543 = sand.u32 %s94, 1
          %s544 = scalar_lea.sflag [#allocation3], %s543
          %s545 = sand.u32 %s94, 1
          %s546 = scalar_lea.vmem [#allocation2], %s545
          %548 = dma.done %s544, 16
        $region44: #{embedding_extractor_forward.1} parent=39 // pred_fallthru
          _
      $region40: #{embedding_extractor_forward.1} parent=5 // pred_fallthru
        _
    $region6: #{embedding_extractor_forward.1} parent=1 // loop_footer
      %s16 = sadd.s32 1, %s12
    $region7: #{embedding_extractor_forward.1} parent=1 // loop_footer_branch
      %11 = sbr.rel target = $region3
    $region8: #{embedding_extractor_forward.1} parent=1 // loop_exit
      _
    %549 = vsyncpa [#allocation3], 1
    %s550 = scalar_lea.sflag [#allocation3], 1
    %551 = vsyncpa %s550, 1

</llo_original>
